<compile_context>
chip_gen: v7x
topology: tpu7x:2x2x1
jax: 0.10.0
libtpu: 0.0.40
codegen_flags: <defaults>
</compile_context>

<pallas_src>
import functools

import jax
import jax.numpy as jnp
from jax.experimental import pallas as pl
from jax.experimental.pallas import tpu as pltpu


def _round_up(x, m):
    return ((x + m - 1) // m) * m


def _pad_c(c):
    """Pad a channel count up to a multiple of 128 (lane-dense stores)."""
    return _round_up(c, 128)


# ----------------------------------------------------------------------------
# Generation-aware configuration (review items: VMEM budget, TM cap, dw dtype)
# ----------------------------------------------------------------------------

def _vmem_budget_bytes():
    """~75% of physical VMEM: ~96 MiB on v5e/v6e (128 MiB), ~48 MiB on v7x (64 MiB)."""
    try:
        cap = int(pltpu.get_tpu_info().vmem_capacity_bytes)
    except Exception:
        cap = 64 * 1024 * 1024          # conservative fallback (v7x-sized)
    return max(32 * 1024 * 1024, min((cap * 3) // 4, 96 * 1024 * 1024))


VMEM_BUDGET = _vmem_budget_bytes()
# Matmul M-tile cap: 2048 on v5e/v6e, 1024 on v7x (smaller physical VMEM).
TM_CAP = 2048 if VMEM_BUDGET >= (64 << 20) else 1024


def _dw_compute_dtype():
    """bf16 MAC math on v6e/v7x (bf16-capable VALUs ~2x throughput); f32 on v5e."""
    try:
        kind = jax.devices()[0].device_kind.lower()
    except Exception:
        kind = ""
    return jnp.float32 if "v5" in kind else jnp.bfloat16


DW_DTYPE = _dw_compute_dtype()


@functools.lru_cache(maxsize=None)
def _single_buffer_supported():
    """Probe once whether pipeline_mode=pl.Buffered(1) compiles/runs; else fall back."""
    def _probe_kernel(x_ref, o_ref):
        o_ref[...] = x_ref[...] * 2.0
    try:
        f = pl.pallas_call(
            _probe_kernel,
            grid=(2,),
            in_specs=[pl.BlockSpec((8, 128), lambda i: (0, 0),
                                   pipeline_mode=pl.Buffered(1))],
            out_specs=pl.BlockSpec((8, 128), lambda i: (i, 0)),
            out_shape=jax.ShapeDtypeStruct((16, 128), jnp.float32),
        )
        jax.block_until_ready(f(jnp.ones((8, 128), jnp.float32)))
        return True
    except Exception:
        return False


def _invariant_spec(shape, index_map):
    """BlockSpec for a grid-invariant operand: single-buffered when supported."""
    if _single_buffer_supported():
        return pl.BlockSpec(shape, index_map, pipeline_mode=pl.Buffered(1))
    return pl.BlockSpec(shape, index_map)


# ----------------------------------------------------------------------------
# Pallas kernels
# ----------------------------------------------------------------------------

def _matmul_bias_kernel(x_ref, w_ref, b_ref, o_ref, *, relu6):
    """(TM,K)bf16 @ (K,N)bf16 + bias(f32) [+ ReLU6] -> (TM,N)bf16, f32 accumulate."""
    acc = jnp.dot(x_ref[...], w_ref[...], preferred_element_type=jnp.float32)
    acc = acc + b_ref[...].astype(jnp.float32)
    if relu6:
        acc = jnp.clip(acc, 0.0, 6.0)
    o_ref[...] = acc.astype(o_ref.dtype)


def _matmul_bias_res_kernel(x_ref, w_ref, b_ref, r_ref, o_ref):
    """(TM,K) @ (K,N) + bias + residual -> (TM,N) (project conv of a residual block)."""
    acc = jnp.dot(x_ref[...], w_ref[...], preferred_element_type=jnp.float32)
    acc = acc + b_ref[...].astype(jnp.float32) + r_ref[...].astype(jnp.float32)
    o_ref[...] = acc.astype(o_ref.dtype)


def _dwconv3x3_kernel(x_ref, w_ref, b_ref, o_ref, *, stride, plane_h, row_chunk,
                      compute_dtype):
    """Depthwise 3x3 + folded-BN bias + ReLU6, exact strided output.

    x_ref: (1, P*plane_h, Wp, TC) where P = stride*stride parity planes are stacked
           along the row axis (space-to-depth for stride 2; plain padded image for
           stride 1).
    w_ref: (9, TC)   b_ref: (1, TC)   o_ref: (1, Ho, Wo, TC)

    Per review: each tap loads x_ref directly with its (row, col) offset so the column
    shift is folded into the vld address (no cached, re-sliced f32 slab temporaries),
    and the multiply/accumulate chain runs in `compute_dtype` (bf16 on v6e/v7x).
    """
    _, Ho, Wo, TC = o_ref.shape
    s = stride
    # Hoisted once per grid step (JAX does not CSE broadcasts).
    bias = b_ref[0:1, :].astype(compute_dtype).reshape(1, 1, TC)
    taps = [w_ref[k:k + 1, :].astype(compute_dtype).reshape(1, 1, TC) for k in range(9)]

    for r0 in range(0, Ho, row_chunk):          # static in-kernel row chunking
        rc = min(row_chunk, Ho - r0)
        acc = None
        for di in range(3):
            for dj in range(3):
                p = (di % s) * s + (dj % s)      # parity plane
                ro, co = di // s, dj // s        # within-plane offsets
                base = p * plane_h + r0 + ro
                xin = x_ref[0, base:base + rc, co:co + Wo, :].astype(compute_dtype)
                term = xin * taps[di * 3 + dj]
                acc = term if acc is None else acc + term
        acc = jnp.clip(acc + bias, 0.0, 6.0)
        o_ref[0, r0:r0 + rc, :, :] = acc.astype(o_ref.dtype)


def _avgpool_kernel(x_ref, o_ref):
    """Global average pool for one batch element: (1,H,W,C) -> (1,1,C)."""
    o_ref[0] = jnp.mean(x_ref[...].astype(jnp.float32), axis=(1, 2))


# ----------------------------------------------------------------------------
# Pallas wrappers
# ----------------------------------------------------------------------------

def _pick_tm(M, K, N, has_residual):
    """Largest M-tile (multiple of 16, capped per generation) whose double-buffered
    x/out (+residual) blocks plus the resident weight fit the VMEM budget."""
    fixed = 2 * (2 * K * N + 4 * N)            # conservative: 2 copies of w + bias
    per_row = 2 * 2 * (K + N)                  # double-buffered bf16 x + out rows
    if has_residual:
        per_row += 2 * 2 * N                   # double-buffered bf16 residual rows
    avail = int(VMEM_BUDGET * 0.8) - fixed
    tm = max(16, avail // per_row)
    tm = min(tm, TM_CAP, _round_up(max(M, 1), 16))
    return max(16, (tm // 16) * 16)            # bf16 sublane pack: multiple of 16


def matmul_bias(x, w, b, *, relu6=False, residual=None):
    """y = x @ w + b [+ residual] [then ReLU6].  x:(M,K)  w:(K,N)  b:(N,)."""
    M, K = x.shape
    N = w.shape[1]
    TM = _pick_tm(M, K, N, residual is not None)
    grid = (pl.cdiv(M, TM),)          # ragged last block handled by Pallas (masked)

    x_spec = pl.BlockSpec((TM, K), lambda i: (i, 0))
    w_spec = _invariant_spec((K, N), lambda i: (0, 0))   # grid-invariant: 1 buffer
    b_spec = _invariant_spec((1, N), lambda i: (0, 0))
    o_spec = pl.BlockSpec((TM, N), lambda i: (i, 0))
    out_shape = jax.ShapeDtypeStruct((M, N), jnp.bfloat16)
    cparams = pltpu.CompilerParams(dimension_semantics=("parallel",),
                                   vmem_limit_bytes=VMEM_BUDGET)

    x = x.astype(jnp.bfloat16)
    w = w.astype(jnp.bfloat16)
    b2 = b.reshape(1, N).astype(jnp.float32)

    if residual is None:
        return pl.pallas_call(
            functools.partial(_matmul_bias_kernel, relu6=relu6),
            grid=grid,
            in_specs=[x_spec, w_spec, b_spec],
            out_specs=o_spec,
            out_shape=out_shape,
            compiler_params=cparams,
        )(x, w, b2)
    r_spec = pl.BlockSpec((TM, N), lambda i: (i, 0))
    return pl.pallas_call(
        _matmul_bias_res_kernel,
        grid=grid,
        in_specs=[x_spec, w_spec, b_spec, r_spec],
        out_specs=o_spec,
        out_shape=out_shape,
        compiler_params=cparams,
    )(x, w, b2, residual.astype(jnp.bfloat16))


def depthwise_conv3x3(x, w9, b, *, stride):
    """Depthwise 3x3 conv, padding=1, folded-BN bias, ReLU6.  x:(N,H,W,C) NHWC bf16.

    stride=2 uses a space-to-depth split (JAX glue, one pass) so the kernel computes
    exactly the strided output with no strided in-kernel access and no post-decimation.
    """
    N, H, W, C = x.shape
    xp = jnp.pad(x, ((0, 0), (1, 1), (1, 1), (0, 0)))
    if stride == 2:
        assert H % 2 == 0 and W % 2 == 0, "stride-2 depthwise needs even spatial dims"
        Ho, Wo = H // 2, W // 2
        ph, pw = Ho + 1, Wo + 1
        # (N,H+2,W+2,C) -> (N, 4 parity planes stacked on rows, pw, C)
        x5 = xp.reshape(N, ph, 2, pw, 2, C).transpose(0, 2, 4, 1, 3, 5)
        xin = x5.reshape(N, 4 * ph, pw, C)
        plane_h, P, Wp = ph, 4, pw
    else:
        Ho, Wo = H, W
        xin = xp
        plane_h, P, Wp = H + 2, 1, W + 2

    TC = 128                                  # channel tile: no halo, lane-dense
    assert C % TC == 0
    row_chunk = min(Ho, 16)                   # bounds in-kernel live values
    # TODO(synk): add a third (parallel) grid axis over output-row tiles with a halo'd
    #             input window so both v7x TensorCores get work on small-batch layers.

    kern = functools.partial(_dwconv3x3_kernel, stride=stride, plane_h=plane_h,
                             row_chunk=row_chunk, compute_dtype=DW_DTYPE)
    return pl.pallas_call(
        kern,
        grid=(N, C // TC),
        in_specs=[
            pl.BlockSpec((1, P * plane_h, Wp, TC), lambda n, c: (n, 0, 0, c)),
            pl.BlockSpec((9, TC), lambda n, c: (0, c)),
            pl.BlockSpec((1, TC), lambda n, c: (0, c)),
        ],
        out_specs=pl.BlockSpec((1, Ho, Wo, TC), lambda n, c: (n, 0, 0, c)),
        out_shape=jax.ShapeDtypeStruct((N, Ho, Wo, C), jnp.bfloat16),
        compiler_params=pltpu.CompilerParams(
            dimension_semantics=("parallel", "parallel"),
            vmem_limit_bytes=VMEM_BUDGET),
    )(xin, w9, b.reshape(1, C).astype(jnp.float32))


def global_avg_pool(x):
    """(N,H,W,C) bf16 -> (N,C) f32, gridded over batch."""
    N, H, W, C = x.shape
    out = pl.pallas_call(
        _avgpool_kernel,
        grid=(N,),
        in_specs=[pl.BlockSpec((1, H, W, C), lambda n: (n, 0, 0, 0))],
        out_specs=pl.BlockSpec((1, 1, C), lambda n: (n, 0, 0)),
        out_shape=jax.ShapeDtypeStruct((N, 1, C), jnp.float32),
        compiler_params=pltpu.CompilerParams(dimension_semantics=("parallel",),
                                             vmem_limit_bytes=VMEM_BUDGET),
    )(x)
    return out.reshape(N, C)


# ----------------------------------------------------------------------------
# MobileNetV2 (inference, BN folded into conv weights/bias, channels lane-padded)
# ----------------------------------------------------------------------------

MOBILENET_V2_CFG = [  # (expand_ratio, out_channels, num_blocks, stride)
    (1, 16, 1, 1),
    (6, 24, 2, 2),
    (6, 32, 3, 2),
    (6, 64, 4, 2),
    (6, 96, 3, 1),
    (6, 160, 3, 2),
    (6, 320, 1, 1),
]


def _fold_bn(key, w_shape, c_out, fan_in):
    """Deterministic conv weight + BN params folded into (w_folded, b_folded)."""
    kw, kg, kb, km = jax.random.split(key, 4)
    w = jax.random.normal(kw, w_shape, jnp.float32) * jnp.sqrt(2.0 / fan_in)
    gamma = 1.0 + 0.1 * jax.random.normal(kg, (c_out,), jnp.float32)
    beta = 0.1 * jax.random.normal(kb, (c_out,), jnp.float32)
    mean = 0.1 * jax.random.normal(km, (c_out,), jnp.float32)
    var = jnp.ones((c_out,), jnp.float32)
    scale = gamma / jnp.sqrt(var + 1e-5)
    return w * scale, beta - mean * scale       # out-channel axis is last


def _pw_params(key, c_in_real, c_out_real, c_in_pad, c_out_pad):
    w, b = _fold_bn(key, (c_in_real, c_out_real), c_out_real, c_in_real)
    w = jnp.pad(w, ((0, c_in_pad - c_in_real), (0, c_out_pad - c_out_real)))
    b = jnp.pad(b, (0, c_out_pad - c_out_real))
    return w.astype(jnp.bfloat16), b            # padded out-cols/bias are exactly 0


def _dw_params(key, c_real, c_pad):
    w, b = _fold_bn(key, (9, c_real), c_real, 9)   # (9, C): 3x3 taps row-major
    w = jnp.pad(w, ((0, 0), (0, c_pad - c_real)))
    b = jnp.pad(b, (0, c_pad - c_real))
    return w, b                                  # f32 (tiny; cast in-kernel)


def _stem_params(key):
    # Contraction dim padded 27 -> 32 (bf16 sublane pack), out channels 32 -> 128.
    w, b = _fold_bn(key, (27, 32), 32, 27)       # (kh*kw*cin, cout)
    w = jnp.pad(w, ((0, 32 - 27), (0, _pad_c(32) - 32)))
    b = jnp.pad(b, (0, _pad_c(32) - 32))
    return w.astype(jnp.bfloat16), b


def init_mobilenet_v2_params(key):
    keys = iter(jax.random.split(key, 64))
    params = {"stem": _stem_params(next(keys))}
    blocks = []
    c_in = 32
    for t, c, n, s in MOBILENET_V2_CFG:
        for i in range(n):
            stride = s if i == 0 else 1
            hidden = c_in * t
            blk = {"stride": stride, "use_res": (stride == 1 and c_in == c)}
            if t != 1:
                blk["expand"] = _pw_params(next(keys), c_in, hidden,
                                           _pad_c(c_in), _pad_c(hidden))
            blk["dw"] = _dw_params(next(keys), hidden, _pad_c(hidden))
            blk["project"] = _pw_params(next(keys), hidden, c,
                                        _pad_c(hidden), _pad_c(c))
            blocks.append(blk)
            c_in = c
    params["blocks"] = blocks
    params["head"] = _pw_params(next(keys), 320, 1280, _pad_c(320), 1280)
    return params


def _pointwise(x_nhwc, w, b, *, relu6, residual=None):
    N, H, W, C = x_nhwc.shape
    x2 = x_nhwc.reshape(N * H * W, C)
    r2 = residual.reshape(N * H * W, residual.shape[-1]) if residual is not None else None
    y2 = matmul_bias(x2, w, b, relu6=relu6, residual=r2)
    return y2.reshape(N, H, W, w.shape[1])


def _im2col_3x3_s2(x):
    """Glue: extract 3x3 stride-2 patches (padding=1).  x:(N,H,W,C) -> (N*Ho*Wo, Kpad).

    The contraction dim 9*C (=27 for RGB) is zero-padded to a multiple of 32 to keep
    the bf16 matmul operand tile-aligned (matches the stem weight's padded rows).
    TODO(synk): assumes even H and W (true for 32x32 / 224x224 MobileNetV2 inputs).
    """
    N, H, W, C = x.shape
    xp = jnp.pad(x, ((0, 0), (1, 1), (1, 1), (0, 0)))
    Ho, Wo = H // 2, W // 2
    cols = []
    for di in range(3):
        for dj in range(3):
            cols.append(xp[:, di:di + 2 * Ho:2, dj:dj + 2 * Wo:2, :])
    patches = jnp.stack(cols, axis=3)                 # (N, Ho, Wo, 9, C)
    flat = patches.reshape(N * Ho * Wo, 9 * C)
    k_pad = _round_up(9 * C, 32)
    flat = jnp.pad(flat, ((0, 0), (0, k_pad - 9 * C)))
    return flat, (N, Ho, Wo)


def mobilenet_v2_features(params, x_nchw):
    """ClientModel.forward: MobileNetV2 features -> global avg pool -> (N, 1280)."""
    x = jnp.transpose(x_nchw, (0, 2, 3, 1)).astype(jnp.bfloat16)   # NCHW -> NHWC

    # Stem: 3x3 s2 ConvBNReLU6 via im2col + Pallas matmul (out channels padded to 128).
    cols, (N, Ho, Wo) = _im2col_3x3_s2(x)
    w, b = params["stem"]
    x = matmul_bias(cols, w, b, relu6=True).reshape(N, Ho, Wo, w.shape[1])

    # Inverted residual blocks (all channel dims padded to multiples of 128; padded
    # lanes stay exactly zero through expand / depthwise / project / residual add).
    # TODO(synk): fuse project -> next expand into one pallas_call (VMEM-resident
    #             intermediate) to cut the padded-channel HBM traffic on v5e.
    for blk in params["blocks"]:
        inp = x
        if "expand" in blk:
            w, b = blk["expand"]
            x = _pointwise(x, w, b, relu6=True)
        w, b = blk["dw"]
        x = depthwise_conv3x3(x, w, b, stride=blk["stride"])
        w, b = blk["project"]
        x = _pointwise(x, w, b, relu6=False,
                       residual=inp if blk["use_res"] else None)

    # Head: 1x1 ConvBNReLU6 320(pad 384) -> 1280, global average pool; classifier=Identity.
    w, b = params["head"]
    x = _pointwise(x, w, b, relu6=True)
    return global_avg_pool(x)   # (N, 1280) f32


if __name__ == "__main__":
    key = jax.random.PRNGKey(0)
    pkey, xkey = jax.random.split(key)
    params = init_mobilenet_v2_params(pkey)
    # Small NCHW input (spatial 32 keeps every stride-2 stage even).
    x = jax.random.normal(xkey, (2, 3, 32, 32), jnp.float32)
    feats = mobilenet_v2_features(params, x)
    feats = jax.block_until_ready(feats)
    assert feats.shape == (2, 1280), feats.shape
    assert bool(jnp.all(jnp.isfinite(feats)))
    print("KERNEL_OK")
</pallas_src>

<mosaic_0001>
module attributes {stable_mosaic.version = 11 : i64} {
  func.func @_probe_kernel(%arg0: i32, %arg1: memref<8x128xf32, #tpu.memory_space<vmem>>, %arg2: memref<8x128xf32, #tpu.memory_space<vmem>>) attributes {dimension_semantics = [#tpu.dimension_semantics<arbitrary>], iteration_bounds = array<i64: 2>, scalar_prefetch = 0 : i64, scratch_operands = 0 : i64, tpu.core_type = #tpu.core_type<tc>, window_params = [{pipeline_mode = #tpu.pipeline_mode<synchronous>, transform_indices = @transform_0, window_bounds = array<i64: 8, 128>}, {transform_indices = @transform_1, window_bounds = array<i64: 8, 128>}]} {
    %c0 = arith.constant 0 : index
    %c0_0 = arith.constant 0 : index
    %0 = vector.load %arg1[%c0, %c0_0] : memref<8x128xf32, #tpu.memory_space<vmem>>, vector<8x128xf32>
    %cst = arith.constant 2.000000e+00 : f32
    %1 = vector.broadcast %cst : f32 to vector<8x128xf32>
    %2 = arith.mulf %0, %1 : vector<8x128xf32>
    %c0_1 = arith.constant 0 : index
    %c0_2 = arith.constant 0 : index
    %3 = vector.load %arg2[%c0_1, %c0_2] : memref<8x128xf32, #tpu.memory_space<vmem>>, vector<8x128xf32>
    tpu.vector_store %arg2[%c0_1, %c0_2], %2 {strides = array<i32>} : memref<8x128xf32, #tpu.memory_space<vmem>>, vector<8x128xf32>,
    return
  }
  func.func @transform_0(%arg0: i32) -> (i32, i32) {
    %c0_i32 = arith.constant 0 : i32
    %c0_i32_0 = arith.constant 0 : i32
    %c0_i32_1 = arith.constant 0 : i32
    return %c0_i32, %c0_i32_0 : i32, i32
  }
  func.func @transform_1(%arg0: i32) -> (i32, i32) {
    %c0_i32 = arith.constant 0 : i32
    %c0_i32_0 = arith.constant 0 : i32
    return %arg0, %c0_i32 : i32, i32
  }
}

module attributes {stable_mosaic.version = 11 : i64} {
  func.func @_matmul_bias_kernel(%arg0: i32, %arg1: memref<512x32xbf16, #tpu.memory_space<vmem>>, %arg2: memref<32x128xbf16, #tpu.memory_space<vmem>>, %arg3: memref<1x128xf32, #tpu.memory_space<vmem>>, %arg4: memref<512x128xbf16, #tpu.memory_space<vmem>>) attributes {dimension_semantics = [#tpu.dimension_semantics<parallel>], iteration_bounds = array<i64: 1>, scalar_prefetch = 0 : i64, scratch_operands = 0 : i64, tpu.core_type = #tpu.core_type<tc>, window_params = [{transform_indices = @transform_0, window_bounds = array<i64: 512, 32>}, {pipeline_mode = #tpu.pipeline_mode<synchronous>, transform_indices = @transform_1, window_bounds = array<i64: 32, 128>}, {pipeline_mode = #tpu.pipeline_mode<synchronous>, transform_indices = @transform_2, window_bounds = array<i64: 1, 128>}, {transform_indices = @transform_3, window_bounds = array<i64: 512, 128>}]} {
    %c0 = arith.constant 0 : index
    %c0_0 = arith.constant 0 : index
    %0 = vector.load %arg1[%c0, %c0_0] : memref<512x32xbf16, #tpu.memory_space<vmem>>, vector<512x32xbf16>
    %c0_1 = arith.constant 0 : index
    %c0_2 = arith.constant 0 : index
    %1 = vector.load %arg2[%c0_1, %c0_2] : memref<32x128xbf16, #tpu.memory_space<vmem>>, vector<32x128xbf16>
    %cst = arith.constant dense<0.000000e+00> : vector<512x128xf32>
    %2 = tpu.matmul %0, %1, %cst {dimension_numbers = #tpu.dot_dimension_numbers<[1], [0], [0], [1], [0, 0, 1, 1], [], []>} : vector<512x32xbf16>, vector<32x128xbf16>, vector<512x128xf32> -> vector<512x128xf32>
    %c0_3 = arith.constant 0 : index
    %c0_4 = arith.constant 0 : index
    %3 = vector.load %arg3[%c0_3, %c0_4] : memref<1x128xf32, #tpu.memory_space<vmem>>, vector<1x128xf32>
    %4 = vector.broadcast %3 : vector<1x128xf32> to vector<512x128xf32>
    %5 = arith.addf %2, %4 : vector<512x128xf32>
    %cst_5 = arith.constant 0.000000e+00 : f32
    %cst_6 = arith.constant 6.000000e+00 : f32
    %6 = vector.broadcast %cst_5 : f32 to vector<512x128xf32>
    %7 = arith.maximumf %6, %5 : vector<512x128xf32>
    %8 = vector.broadcast %cst_6 : f32 to vector<512x128xf32>
    %9 = arith.minimumf %8, %7 : vector<512x128xf32>
    %10 = arith.truncf %9 : vector<512x128xf32> to vector<512x128xbf16>
    %c0_7 = arith.constant 0 : index
    %c0_8 = arith.constant 0 : index
    %11 = vector.load %arg4[%c0_7, %c0_8] : memref<512x128xbf16, #tpu.memory_space<vmem>>, vector<512x128xbf16>
    tpu.vector_store %arg4[%c0_7, %c0_8], %10 {strides = array<i32>} : memref<512x128xbf16, #tpu.memory_space<vmem>>, vector<512x128xbf16>,
    return
  }
  func.func @transform_0(%arg0: i32) -> (i32, i32) {
    %c0_i32 = arith.constant 0 : i32
    %c0_i32_0 = arith.constant 0 : i32
    return %arg0, %c0_i32 : i32, i32
  }
  func.func @transform_1(%arg0: i32) -> (i32, i32) {
    %c0_i32 = arith.constant 0 : i32
    %c0_i32_0 = arith.constant 0 : i32
    %c0_i32_1 = arith.constant 0 : i32
    return %c0_i32, %c0_i32_0 : i32, i32
  }
  func.func @transform_2(%arg0: i32) -> (i32, i32) {
    %c0_i32 = arith.constant 0 : i32
    %c0_i32_0 = arith.constant 0 : i32
    %c0_i32_1 = arith.constant 0 : i32
    return %c0_i32, %c0_i32_0 : i32, i32
  }
  func.func @transform_3(%arg0: i32) -> (i32, i32) {
    %c0_i32 = arith.constant 0 : i32
    %c0_i32_0 = arith.constant 0 : i32
    return %arg0, %c0_i32 : i32, i32
  }
}

</mosaic_0001>

<llo_original>
// kernel: tpu_custom_call.1
$region0: #{tpu_custom_call.1}
  #allocation0 [shape = 'u32[]', space=smem, size = 0x4, offset = 0x4, fixed_abs, tag = 'smem constant byte address 0x4 - core index']
  #allocation1 [shape = 'u32[144,128]{1,0:T(1,128)}', space=vmem, size = 0x12000, scoped, tag = 'internal scratch']
  %s0 = inlined_call_operand.hbm [shape: f32[8,128], index: 0, kind: input, shape index: {}]
  %s1 = inlined_call_operand.hbm [shape: f32[16,128], index: 1, kind: output, shape index: {}]
  %s2 = sld [smem:[#allocation0]]
  $region41: #{tpu_custom_call.1} parent=0
    _
  %s4 = ssub.s32 1, %s2
  %s5 = scalar_select 0, %s4, %s2
  $region1: #{tpu_custom_call.1} parent=0
    #allocation2 [shape = 'u8[4096]{0}', space=vmem, size = 0x1000, scoped, tag = 'input window, operand 0, single buffered']
    #allocation3 [shape = 's32[2]{0}', space=sflag, size = 0x8, scoped, tag = 'scoped memory for tpu_custom_call.1']
    #allocation4 [shape = 's32[2]{0}', space=sflag, size = 0x8, scoped, tag = 'scoped memory for tpu_custom_call.1']
    #allocation5 [shape = 'u8[8192]{0}', space=vmem, size = 0x2000, scoped, tag = 'output window, operand 0']
    %6 = vsyncpa [#allocation3], 0
    %7 = vsyncpa [#allocation4], 0
    %s8 = scalar_lea.sflag [#allocation4], 1
    %9 = vsyncpa %s8, 0
    loop: start=0, step=1, limit=4
    $region2: #{tpu_custom_call.1} parent=1 // loop_pre_header
      _
    $region3: #{tpu_custom_call.1} parent=1 // loop_header
      %s11 = sphi 0, %s15
      %p12 = scmp.ge.s32.totalorder %s11, 4
      %s19 = sphi 0, %s19
      %s21 = sphi 0, %s19
      %s22 = sphi 0, %s21
      %s36 = sphi 0, %s22
      %s42 = sphi 0, %s44
      %s45 = sphi 0, %s42
      %s46 = sphi 0, %s45
      %s62 = sphi 0, %s46
    $region4: #{tpu_custom_call.1} parent=1 // loop_header_branch
      %14 = sbr.rel (%p12) target = $region8
    $region5: #{tpu_custom_call.1} parent=1 // loop_body
      %s16 = ssub.s32 %s11, 1
      %s17 = ssub.s32 %s11, 2
      %s18 = sadd.s32 %s11, 1
      %s20 = sadd.s32 %s19, 1
      %p23 = scmp.eq.s32.totalorder %s11, 1
      %p24 = scmp.ne.s32.totalorder %s19, %s21
      %p25 = scmp.eq.s32.totalorder %s11, 0
      %p26 = por %p24, %p25
      %p27 = scmp.ne.s32.totalorder %s19, %s21
      %p28 = scmp.eq.s32.totalorder %s16, 1
      %p29 = por %p27, %p28
      %p30 = scmp.ne.s32.totalorder %s21, %s22
      %p31 = scmp.eq.s32.totalorder %s16, 0
      %p32 = por %p30, %p31
      %p33 = scmp.ne.s32.totalorder %s21, %s22
      %p34 = scmp.eq.s32.totalorder %s17, 1
      %p35 = por %p33, %p34
      %p37 = scmp.ne.s32.totalorder %s22, %s36
      %p38 = scmp.eq.s32.totalorder %s17, 0
      %p39 = por %p37, %p38
      %s40 = ssub.s32 %s11, %s18
      %p41 = scmp.eq.s32.totalorder %s40, 0
      %s43 = sadd.s32 %s42, 1
      %s44 = scalar_select %p41, %s42, %s43
      %p47 = pneg %p41
      %p48 = scmp.eq.s32.totalorder %s11, 1
      %p49 = por %p47, %p48
      %p50 = scmp.ne.s32.totalorder %s42, %s45
      %p51 = scmp.eq.s32.totalorder %s11, 0
      %p52 = por %p50, %p51
      %p53 = scmp.ne.s32.totalorder %s42, %s45
      %p54 = scmp.eq.s32.totalorder %s16, 1
      %p55 = por %p53, %p54
      %p56 = scmp.ne.s32.totalorder %s45, %s46
      %p57 = scmp.eq.s32.totalorder %s16, 0
      %p58 = por %p56, %p57
      %p59 = scmp.ne.s32.totalorder %s45, %s46
      %p60 = scmp.eq.s32.totalorder %s17, 1
      %p61 = por %p59, %p60
      %p63 = scmp.ne.s32.totalorder %s46, %s62
      %p64 = scmp.eq.s32.totalorder %s17, 0
      %p65 = por %p63, %p64
      %p66 = scmp.le.s32.totalorder 1, %s11
      %p67 = scmp.lt.s32.totalorder %s11, 3
      %p68 = pnand %p66, %p67
      %p69 = pneg %p68
      // Predicated region
      $region9: #{tpu_custom_call.1} parent=5 // pred_check
        _
      $region10: #{tpu_custom_call.1} parent=5 // pred_check_branch
        %71 = sbr.rel (%p68) target = $region12
      $region11: #{tpu_custom_call.1} parent=5 // pred_region
        %s72 = ssub.s32 %s11, 1
        // Predicated region
        $region13: #{tpu_custom_call.1} parent=11 // pred_check
          %p73 = pneg %p32
        $region14: #{tpu_custom_call.1} parent=11 // pred_check_branch
          %75 = sbr.rel (%p73) target = $region16
        $region15: #{tpu_custom_call.1} parent=11 // pred_region
          %s77 = ssub.s32 128, 128
          %78 = vsyncadd [#allocation3], %s77
          %s80 = sshll.u32 [#allocation2], 4
          %s81 = int_to_ptr.vmem [resolvable:$true] %s80
          %83 = dma.hbm_to_vmem [thread:$0]  %s0, 128, %s81, [#allocation3]
        $region16: #{tpu_custom_call.1} parent=11 // pred_fallthru
          _
      $region12: #{tpu_custom_call.1} parent=5 // pred_fallthru
        _
      %p84 = scmp.lt.s32.totalorder %s11, 2
      // Predicated region
      $region17: #{tpu_custom_call.1} parent=5 // pred_check
        %p85 = pneg %p84
      $region18: #{tpu_custom_call.1} parent=5 // pred_check_branch
        %87 = sbr.rel (%p85) target = $region20
      $region19: #{tpu_custom_call.1} parent=5 // pred_region
        _
      $region20: #{tpu_custom_call.1} parent=5 // pred_fallthru
        _
      %p88 = scmp.le.s32.totalorder 1, %s11
      %p89 = scmp.lt.s32.totalorder %s11, 3
      %p90 = pnand %p88, %p89
      %p91 = pneg %p90
      // Predicated region
      $region21: #{tpu_custom_call.1} parent=5 // pred_check
        _
      $region22: #{tpu_custom_call.1} parent=5 // pred_check_branch
        %93 = sbr.rel (%p90) target = $region24
      $region23: #{tpu_custom_call.1} parent=5 // pred_region
        %s94 = ssub.s32 %s11, 1
        // Predicated region
        $region25: #{tpu_custom_call.1} parent=23 // pred_check
          %p95 = pneg %p32
        $region26: #{tpu_custom_call.1} parent=23 // pred_check_branch
          %97 = sbr.rel (%p95) target = $region28
        $region27: #{tpu_custom_call.1} parent=23 // pred_region
          %98 = dma.done [#allocation3], 128
        $region28: #{tpu_custom_call.1} parent=23 // pred_fallthru
          _
        %p99 = pneg %p32
        %p100 = pneg %p29
        %p101 = pneg %p58
        %p102 = pneg %p55
        %s103 = sand.u32 %s45, 1
        %s104 = scalar_lea.sflag [#allocation4], %s103
        %s105 = sand.u32 %s45, 1
        %s106 = smul.addr %s105, 8
        %s107 = scalar_lea.vmem [#allocation5], %s106
        %v108 = vld [vmem:[#allocation2] sm:$0xff]
        %v109 = vmul.f32 %v108, 2.0
        %110 = vst [vmem:[%s107] sm:$0xff] %v109
        %s111 = sand.u32 %s45, 1
        %s112 = scalar_lea.sflag [#allocation4], %s111
        %s113 = sand.u32 %s45, 1
        %s114 = smul.addr %s113, 8
        %s115 = scalar_lea.vmem [#allocation5], %s114
        // Predicated region
        $region29: #{tpu_custom_call.1} parent=23 // pred_check
          %p116 = pneg %p55
        $region30: #{tpu_custom_call.1} parent=23 // pred_check_branch
          %118 = sbr.rel (%p116) target = $region32
        $region31: #{tpu_custom_call.1} parent=23 // pred_region
          %s120 = ssub.s32 128, 128
          %121 = vsyncadd %s112, %s120
          %s122 = smul.addr %s16, 128
          %s123 = scalar_lea.hbm %s1, %s122
          %s125 = sshll.u32 %s115, 4
          %s126 = int_to_ptr.vmem [resolvable:$true] %s125
          %128 = dma.vmem_to_hbm [thread:$0]  %s126, 128, %s123, %s112
        $region32: #{tpu_custom_call.1} parent=23 // pred_fallthru
          _
      $region24: #{tpu_custom_call.1} parent=5 // pred_fallthru
        _
      %p129 = scmp.le.s32.totalorder 2, %s11
      // Predicated region
      $region33: #{tpu_custom_call.1} parent=5 // pred_check
        %p130 = pneg %p129
      $region34: #{tpu_custom_call.1} parent=5 // pred_check_branch
        %132 = sbr.rel (%p130) target = $region36
      $region35: #{tpu_custom_call.1} parent=5 // pred_region
        %s133 = ssub.s32 %s11, 2
        // Predicated region
        $region37: #{tpu_custom_call.1} parent=35 // pred_check
          %p134 = pneg %p61
        $region38: #{tpu_custom_call.1} parent=35 // pred_check_branch
          %136 = sbr.rel (%p134) target = $region40
        $region39: #{tpu_custom_call.1} parent=35 // pred_region
          %s137 = sand.u32 %s46, 1
          %s138 = scalar_lea.sflag [#allocation4], %s137
          %s139 = sand.u32 %s46, 1
          %s140 = smul.addr %s139, 8
          %s141 = scalar_lea.vmem [#allocation5], %s140
          %142 = dma.done %s138, 128
        $region40: #{tpu_custom_call.1} parent=35 // pred_fallthru
          _
      $region36: #{tpu_custom_call.1} parent=5 // pred_fallthru
        _
    $region6: #{tpu_custom_call.1} parent=1 // loop_footer
      %s15 = sadd.s32 1, %s11
    $region7: #{tpu_custom_call.1} parent=1 // loop_footer_branch
      %10 = sbr.rel target = $region3
    $region8: #{tpu_custom_call.1} parent=1 // loop_exit
      _
    %143 = vsyncpa [#allocation3], 1
    %s144 = scalar_lea.sflag [#allocation3], 1
    %145 = vsyncpa %s144, 1
    %146 = vsyncpa [#allocation4], 1
    %s147 = scalar_lea.sflag [#allocation4], 1
    %148 = vsyncpa %s147, 1

// kernel: tpu_custom_call.1
$region0: #{tpu_custom_call.1}
  #allocation0 [shape = 'u32[]', space=smem, size = 0x4, offset = 0x4, fixed_abs, tag = 'smem constant byte address 0x4 - core index']
  #allocation1 [shape = 'u32[144,128]{1,0:T(1,128)}', space=vmem, size = 0x12000, scoped, tag = 'internal scratch']
  %s0 = inlined_call_operand.vmem [shape: bf16[512,32], index: 0, kind: input, shape index: {}]
  %s1 = inlined_call_operand.vmem [shape: bf16[32,128], index: 1, kind: input, shape index: {}]
  %s2 = inlined_call_operand.vmem [shape: f32[1,128], index: 2, kind: input, shape index: {}]
  %s3 = inlined_call_operand.hbm [shape: bf16[512,128], index: 3, kind: output, shape index: {}]
  %s4 = sld [smem:[#allocation0]]
  $region22: #{tpu_custom_call.1} parent=0
    _
  %s6 = ssub.s32 1, %s4
  %s7 = scalar_select 0, %s6, %s4
  $region1: #{tpu_custom_call.1} parent=0
    #allocation2 [shape = 'u8[131072]{0}', space=vmem, size = 0x20000, scoped, tag = 'output window, operand 0, single buffered']
    #allocation3 [shape = 's32[1]{0}', space=sflag, size = 0x4, scoped, tag = 'scoped memory for tpu_custom_call.1']
    %8 = vsyncpa [#allocation3], 0
    // Predicated region
    $region2: #{tpu_custom_call.1} parent=1 // pred_check
      _
    $region3: #{tpu_custom_call.1} parent=1 // pred_check_branch
      %10 = sbr.rel (0) target = $region5
    $region4: #{tpu_custom_call.1} parent=1 // pred_region
      _
    $region5: #{tpu_custom_call.1} parent=1 // pred_fallthru
      _
    // Predicated region
    $region6: #{tpu_custom_call.1} parent=1 // pred_check
      _
    $region7: #{tpu_custom_call.1} parent=1 // pred_check_branch
      %12 = sbr.rel (0) target = $region9
    $region8: #{tpu_custom_call.1} parent=1 // pred_region
      _
    $region9: #{tpu_custom_call.1} parent=1 // pred_fallthru
      _
    // Predicated region
    $region10: #{tpu_custom_call.1} parent=1 // pred_check
      _
    $region11: #{tpu_custom_call.1} parent=1 // pred_check_branch
      %14 = sbr.rel (0) target = $region13
    $region12: #{tpu_custom_call.1} parent=1 // pred_region
      _
    $region13: #{tpu_custom_call.1} parent=1 // pred_fallthru
      _
    %v16 = vld [vmem:[%s0] sm:$0xf]
    %v17 = vld [vmem:[%s0 + $0x4] sm:$0xf]
    %v18 = vld [vmem:[%s0 + $0x8] sm:$0xf]
    %v19 = vld [vmem:[%s0 + $0xc] sm:$0xf]
    %v20 = vld [vmem:[%s0 + $0x10] sm:$0xf]
    %v21 = vld [vmem:[%s0 + $0x14] sm:$0xf]
    %v22 = vld [vmem:[%s0 + $0x18] sm:$0xf]
    %v23 = vld [vmem:[%s0 + $0x1c] sm:$0xf]
    %v24 = vld [vmem:[%s0 + $0x20] sm:$0xf]
    %v25 = vld [vmem:[%s0 + $0x24] sm:$0xf]
    %v26 = vld [vmem:[%s0 + $0x28] sm:$0xf]
    %v27 = vld [vmem:[%s0 + $0x2c] sm:$0xf]
    %v28 = vld [vmem:[%s0 + $0x30] sm:$0xf]
    %v29 = vld [vmem:[%s0 + $0x34] sm:$0xf]
    %v30 = vld [vmem:[%s0 + $0x38] sm:$0xf]
    %v31 = vld [vmem:[%s0 + $0x3c] sm:$0xf]
    %v32 = vld [vmem:[%s0 + $0x40] sm:$0xf]
    %v33 = vld [vmem:[%s0 + $0x44] sm:$0xf]
    %v34 = vld [vmem:[%s0 + $0x48] sm:$0xf]
    %v35 = vld [vmem:[%s0 + $0x4c] sm:$0xf]
    %v36 = vld [vmem:[%s0 + $0x50] sm:$0xf]
    %v37 = vld [vmem:[%s0 + $0x54] sm:$0xf]
    %v38 = vld [vmem:[%s0 + $0x58] sm:$0xf]
    %v39 = vld [vmem:[%s0 + $0x5c] sm:$0xf]
    %v40 = vld [vmem:[%s0 + $0x60] sm:$0xf]
    %v41 = vld [vmem:[%s0 + $0x64] sm:$0xf]
    %v42 = vld [vmem:[%s0 + $0x68] sm:$0xf]
    %v43 = vld [vmem:[%s0 + $0x6c] sm:$0xf]
    %v44 = vld [vmem:[%s0 + $0x70] sm:$0xf]
    %v45 = vld [vmem:[%s0 + $0x74] sm:$0xf]
    %v46 = vld [vmem:[%s0 + $0x78] sm:$0xf]
    %v47 = vld [vmem:[%s0 + $0x7c] sm:$0xf]
    %v48 = vld [vmem:[%s0 + $0x80] sm:$0xf]
    %v49 = vld [vmem:[%s0 + $0x84] sm:$0xf]
    %v50 = vld [vmem:[%s0 + $0x88] sm:$0xf]
    %v51 = vld [vmem:[%s0 + $0x8c] sm:$0xf]
    %v52 = vld [vmem:[%s0 + $0x90] sm:$0xf]
    %v53 = vld [vmem:[%s0 + $0x94] sm:$0xf]
    %v54 = vld [vmem:[%s0 + $0x98] sm:$0xf]
    %v55 = vld [vmem:[%s0 + $0x9c] sm:$0xf]
    %v56 = vld [vmem:[%s0 + $0xa0] sm:$0xf]
    %v57 = vld [vmem:[%s0 + $0xa4] sm:$0xf]
    %v58 = vld [vmem:[%s0 + $0xa8] sm:$0xf]
    %v59 = vld [vmem:[%s0 + $0xac] sm:$0xf]
    %v60 = vld [vmem:[%s0 + $0xb0] sm:$0xf]
    %v61 = vld [vmem:[%s0 + $0xb4] sm:$0xf]
    %v62 = vld [vmem:[%s0 + $0xb8] sm:$0xf]
    %v63 = vld [vmem:[%s0 + $0xbc] sm:$0xf]
    %v64 = vld [vmem:[%s0 + $0xc0] sm:$0xf]
    %v65 = vld [vmem:[%s0 + $0xc4] sm:$0xf]
    %v66 = vld [vmem:[%s0 + $0xc8] sm:$0xf]
    %v67 = vld [vmem:[%s0 + $0xcc] sm:$0xf]
    %v68 = vld [vmem:[%s0 + $0xd0] sm:$0xf]
    %v69 = vld [vmem:[%s0 + $0xd4] sm:$0xf]
    %v70 = vld [vmem:[%s0 + $0xd8] sm:$0xf]
    %v71 = vld [vmem:[%s0 + $0xdc] sm:$0xf]
    %v72 = vld [vmem:[%s0 + $0xe0] sm:$0xf]
    %v73 = vld [vmem:[%s0 + $0xe4] sm:$0xf]
    %v74 = vld [vmem:[%s0 + $0xe8] sm:$0xf]
    %v75 = vld [vmem:[%s0 + $0xec] sm:$0xf]
    %v76 = vld [vmem:[%s0 + $0xf0] sm:$0xf]
    %v77 = vld [vmem:[%s0 + $0xf4] sm:$0xf]
    %v78 = vld [vmem:[%s0 + $0xf8] sm:$0xf]
    %v79 = vld [vmem:[%s0 + $0xfc] sm:$0xf]
    %v80 = vld [vmem:[%s1] sm:$0xf]
    %v81 = vld [vmem:[%s1 + $0x4] sm:$0xf]
    %v82 = vld [vmem:[%s1 + $0x8] sm:$0xf]
    %v83 = vld [vmem:[%s1 + $0xc] sm:$0xf]
    %v84 = vld [vmem:[%s2] sm:$0x1]
    %v86 = vlaneseq
    %v87 = vshrl.u32 %v86, 7
    %v88 = vsub.s32 0, %v87
    %v89 = vrot.slane %v84, %v88
    %v155 = vunpack.c.l.b16 %v16
    %v156 = vunpack.c.l.b16 %v17
    %v157 = vunpack.c.l.b16 %v18
    %v158 = vunpack.c.l.b16 %v19
    %v159 = vunpack.c.l.b16 %v20
    %v160 = vunpack.c.l.b16 %v21
    %v161 = vunpack.c.l.b16 %v22
    %v162 = vunpack.c.l.b16 %v23
    %v163 = vunpack.c.l.b16 %v24
    %v164 = vunpack.c.l.b16 %v25
    %v165 = vunpack.c.l.b16 %v26
    %v166 = vunpack.c.l.b16 %v27
    %v167 = vunpack.c.l.b16 %v28
    %v168 = vunpack.c.l.b16 %v29
    %v169 = vunpack.c.l.b16 %v30
    %v170 = vunpack.c.l.b16 %v31
    %v171 = vunpack.c.l.b16 %v32
    %v172 = vunpack.c.l.b16 %v33
    %v173 = vunpack.c.l.b16 %v34
    %v174 = vunpack.c.l.b16 %v35
    %v175 = vunpack.c.l.b16 %v36
    %v176 = vunpack.c.l.b16 %v37
    %v177 = vunpack.c.l.b16 %v38
    %v178 = vunpack.c.l.b16 %v39
    %v179 = vunpack.c.l.b16 %v40
    %v180 = vunpack.c.l.b16 %v41
    %v181 = vunpack.c.l.b16 %v42
    %v182 = vunpack.c.l.b16 %v43
    %v183 = vunpack.c.l.b16 %v44
    %v184 = vunpack.c.l.b16 %v45
    %v185 = vunpack.c.l.b16 %v46
    %v186 = vunpack.c.l.b16 %v47
    %v187 = vunpack.c.l.b16 %v48
    %v188 = vunpack.c.l.b16 %v49
    %v189 = vunpack.c.l.b16 %v50
    %v190 = vunpack.c.l.b16 %v51
    %v191 = vunpack.c.l.b16 %v52
    %v192 = vunpack.c.l.b16 %v53
    %v193 = vunpack.c.l.b16 %v54
    %v194 = vunpack.c.l.b16 %v55
    %v195 = vunpack.c.l.b16 %v56
    %v196 = vunpack.c.l.b16 %v57
    %v197 = vunpack.c.l.b16 %v58
    %v198 = vunpack.c.l.b16 %v59
    %v199 = vunpack.c.l.b16 %v60
    %v200 = vunpack.c.l.b16 %v61
    %v201 = vunpack.c.l.b16 %v62
    %v202 = vunpack.c.l.b16 %v63
    %v203 = vunpack.c.l.b16 %v64
    %v204 = vunpack.c.l.b16 %v65
    %v205 = vunpack.c.l.b16 %v66
    %v206 = vunpack.c.l.b16 %v67
    %v207 = vunpack.c.l.b16 %v68
    %v208 = vunpack.c.l.b16 %v69
    %v209 = vunpack.c.l.b16 %v70
    %v210 = vunpack.c.l.b16 %v71
    %v211 = vunpack.c.l.b16 %v72
    %v212 = vunpack.c.l.b16 %v73
    %v213 = vunpack.c.l.b16 %v74
    %v214 = vunpack.c.l.b16 %v75
    %v215 = vunpack.c.l.b16 %v76
    %v216 = vunpack.c.l.b16 %v77
    %v217 = vunpack.c.l.b16 %v78
    %v218 = vunpack.c.l.b16 %v79
    %v219 = vpack.c.b16 %v156, %v155
    %v220 = vpack.c.b16 %v158, %v157
    %v221 = vpack.c.b16 %v160, %v159
    %v222 = vpack.c.b16 %v162, %v161
    %v223 = vpack.c.b16 %v164, %v163
    %v224 = vpack.c.b16 %v166, %v165
    %v225 = vpack.c.b16 %v168, %v167
    %v226 = vpack.c.b16 %v170, %v169
    %v227 = vpack.c.b16 %v172, %v171
    %v228 = vpack.c.b16 %v174, %v173
    %v229 = vpack.c.b16 %v176, %v175
    %v230 = vpack.c.b16 %v178, %v177
    %v231 = vpack.c.b16 %v180, %v179
    %v232 = vpack.c.b16 %v182, %v181
    %v233 = vpack.c.b16 %v184, %v183
    %v234 = vpack.c.b16 %v186, %v185
    %v235 = vpack.c.b16 %v188, %v187
    %v236 = vpack.c.b16 %v190, %v189
    %v237 = vpack.c.b16 %v192, %v191
    %v238 = vpack.c.b16 %v194, %v193
    %v239 = vpack.c.b16 %v196, %v195
    %v240 = vpack.c.b16 %v198, %v197
    %v241 = vpack.c.b16 %v200, %v199
    %v242 = vpack.c.b16 %v202, %v201
    %v243 = vpack.c.b16 %v204, %v203
    %v244 = vpack.c.b16 %v206, %v205
    %v245 = vpack.c.b16 %v208, %v207
    %v246 = vpack.c.b16 %v210, %v209
    %v247 = vpack.c.b16 %v212, %v211
    %v248 = vpack.c.b16 %v214, %v213
    %v249 = vpack.c.b16 %v216, %v215
    %v250 = vpack.c.b16 %v218, %v217
    %v255 = vunpack.c.l.b16 %v80
    %v256 = vunpack.c.l.b16 %v81
    %v257 = vunpack.c.l.b16 %v82
    %v258 = vunpack.c.l.b16 %v83
    %v259 = vpack.c.b16 %v256, %v255
    %v260 = vpack.c.b16 %v258, %v257
    %vm263 = vcmask 261120
    %v265 = vsel %vm263, %v219, 0
    %v268 = vsel %vm263, %v220, 0
    %v271 = vsel %vm263, %v221, 0
    %v274 = vsel %vm263, %v222, 0
    %v277 = vsel %vm263, %v223, 0
    %v280 = vsel %vm263, %v224, 0
    %v283 = vsel %vm263, %v225, 0
    %v286 = vsel %vm263, %v226, 0
    %v289 = vsel %vm263, %v227, 0
    %v292 = vsel %vm263, %v228, 0
    %v295 = vsel %vm263, %v229, 0
    %v298 = vsel %vm263, %v230, 0
    %v301 = vsel %vm263, %v231, 0
    %v304 = vsel %vm263, %v232, 0
    %v307 = vsel %vm263, %v233, 0
    %v310 = vsel %vm263, %v234, 0
    %v313 = vsel %vm263, %v235, 0
    %v316 = vsel %vm263, %v236, 0
    %v319 = vsel %vm263, %v237, 0
    %v322 = vsel %vm263, %v238, 0
    %v325 = vsel %vm263, %v239, 0
    %v328 = vsel %vm263, %v240, 0
    %v331 = vsel %vm263, %v241, 0
    %v334 = vsel %vm263, %v242, 0
    %v337 = vsel %vm263, %v243, 0
    %v340 = vsel %vm263, %v244, 0
    %v343 = vsel %vm263, %v245, 0
    %v346 = vsel %vm263, %v246, 0
    %v349 = vsel %vm263, %v247, 0
    %v352 = vsel %vm263, %v248, 0
    %v355 = vsel %vm263, %v249, 0
    %v358 = vsel %vm263, %v250, 0
    %360 = vmatprep.subr.bf16.mxu0 0
    %361 = vmatpush1.bf16.msra.mxu0 %v259
    %362 = vmatprep.subr.bf16.mxu0 0
    %363 = vmatpush1.bf16.msra.mxu0 %v260
    %364 = vmatprep.subr.bf16.mxu0 0
    %365 = vmatpush1.bf16.msra.mxu0 0
    %366 = vmatprep.subr.bf16.mxu0 0
    %367 = vmatpush1.bf16.msra.mxu0 0
    %368 = vmatprep.subr.bf16.mxu0 0
    %369 = vmatpush1.bf16.msra.mxu0 0
    %370 = vmatprep.subr.bf16.mxu0 0
    %371 = vmatpush1.bf16.msra.mxu0 0
    %372 = vmatprep.subr.bf16.mxu0 0
    %373 = vmatpush1.bf16.msra.mxu0 0
    %374 = vmatprep.subr.bf16.mxu0 0
    %375 = vmatpush1.bf16.msra.mxu0 0
    %376 = vmatprep.subr.bf16.mxu0 0
    %377 = vmatpush1.bf16.msra.mxu0 0
    %378 = vmatprep.subr.bf16.mxu0 0
    %379 = vmatpush1.bf16.msra.mxu0 0
    %380 = vmatprep.subr.bf16.mxu0 0
    %381 = vmatpush1.bf16.msra.mxu0 0
    %382 = vmatprep.subr.bf16.mxu0 0
    %383 = vmatpush1.bf16.msra.mxu0 0
    %384 = vmatprep.subr.bf16.mxu0 0
    %385 = vmatpush1.bf16.msra.mxu0 0
    %386 = vmatprep.subr.bf16.mxu0 0
    %387 = vmatpush1.bf16.msra.mxu0 0
    %388 = vmatprep.subr.bf16.mxu0 0
    %389 = vmatpush1.bf16.msra.mxu0 0
    %390 = vmatprep.subr.bf16.mxu0 0
    %391 = vmatpush1.bf16.msra.mxu0 0
    %392 = vmatprep.mubr.bf16.mxu0 0
    %393 = vmatmul.mubr.bf16.gmra.mrb[0].mxu0 %v265
    %v394 = vpop.f32.mrb[0].mxu0
    %v395 = vadd.f32 %v89, %v394
    %v396 = vpop.f32.mrb[0].mxu0
    %v397 = vpop.f32.mrb[0].mxu0
    %v398 = vadd.f32 %v89, %v397
    %v399 = vpop.f32.mrb[0].mxu0
    %400 = vmatprep.mubr.bf16.mxu0 0
    %401 = vmatmul.mubr.bf16.gmra.mrb[0].mxu0 %v268
    %v402 = vpop.f32.mrb[0].mxu0
    %v403 = vadd.f32 %v89, %v402
    %v404 = vpop.f32.mrb[0].mxu0
    %v405 = vpop.f32.mrb[0].mxu0
    %v406 = vadd.f32 %v89, %v405
    %v407 = vpop.f32.mrb[0].mxu0
    %408 = vmatprep.mubr.bf16.mxu0 0
    %409 = vmatmul.mubr.bf16.gmra.mrb[0].mxu0 %v271
    %v410 = vpop.f32.mrb[0].mxu0
    %v411 = vadd.f32 %v89, %v410
    %v412 = vpop.f32.mrb[0].mxu0
    %v413 = vpop.f32.mrb[0].mxu0
    %v414 = vadd.f32 %v89, %v413
    %v415 = vpop.f32.mrb[0].mxu0
    %416 = vmatprep.mubr.bf16.mxu0 0
    %417 = vmatmul.mubr.bf16.gmra.mrb[0].mxu0 %v274
    %v418 = vpop.f32.mrb[0].mxu0
    %v419 = vadd.f32 %v89, %v418
    %v420 = vpop.f32.mrb[0].mxu0
    %v421 = vpop.f32.mrb[0].mxu0
    %v422 = vadd.f32 %v89, %v421
    %v423 = vpop.f32.mrb[0].mxu0
    %424 = vmatprep.mubr.bf16.mxu0 0
    %425 = vmatmul.mubr.bf16.gmra.mrb[0].mxu0 %v277
    %v426 = vpop.f32.mrb[0].mxu0
    %v427 = vadd.f32 %v89, %v426
    %v428 = vpop.f32.mrb[0].mxu0
    %v429 = vpop.f32.mrb[0].mxu0
    %v430 = vadd.f32 %v89, %v429
    %v431 = vpop.f32.mrb[0].mxu0
    %432 = vmatprep.mubr.bf16.mxu0 0
    %433 = vmatmul.mubr.bf16.gmra.mrb[0].mxu0 %v280
    %v434 = vpop.f32.mrb[0].mxu0
    %v435 = vadd.f32 %v89, %v434
    %v436 = vpop.f32.mrb[0].mxu0
    %v437 = vpop.f32.mrb[0].mxu0
    %v438 = vadd.f32 %v89, %v437
    %v439 = vpop.f32.mrb[0].mxu0
    %440 = vmatprep.mubr.bf16.mxu0 0
    %441 = vmatmul.mubr.bf16.gmra.mrb[0].mxu0 %v283
    %v442 = vpop.f32.mrb[0].mxu0
    %v443 = vadd.f32 %v89, %v442
    %v444 = vpop.f32.mrb[0].mxu0
    %v445 = vpop.f32.mrb[0].mxu0
    %v446 = vadd.f32 %v89, %v445
    %v447 = vpop.f32.mrb[0].mxu0
    %448 = vmatprep.mubr.bf16.mxu0 0
    %449 = vmatmul.mubr.bf16.gmra.mrb[0].mxu0 %v286
    %v450 = vpop.f32.mrb[0].mxu0
    %v451 = vadd.f32 %v89, %v450
    %v452 = vpop.f32.mrb[0].mxu0
    %v453 = vpop.f32.mrb[0].mxu0
    %v454 = vadd.f32 %v89, %v453
    %v455 = vpop.f32.mrb[0].mxu0
    %456 = vmatprep.mubr.bf16.mxu0 0
    %457 = vmatmul.mubr.bf16.gmra.mrb[0].mxu0 %v289
    %v458 = vpop.f32.mrb[0].mxu0
    %v459 = vadd.f32 %v89, %v458
    %v460 = vpop.f32.mrb[0].mxu0
    %v461 = vpop.f32.mrb[0].mxu0
    %v462 = vadd.f32 %v89, %v461
    %v463 = vpop.f32.mrb[0].mxu0
    %464 = vmatprep.mubr.bf16.mxu0 0
    %465 = vmatmul.mubr.bf16.gmra.mrb[0].mxu0 %v292
    %v466 = vpop.f32.mrb[0].mxu0
    %v467 = vadd.f32 %v89, %v466
    %v468 = vpop.f32.mrb[0].mxu0
    %v469 = vpop.f32.mrb[0].mxu0
    %v470 = vadd.f32 %v89, %v469
    %v471 = vpop.f32.mrb[0].mxu0
    %472 = vmatprep.mubr.bf16.mxu0 0
    %473 = vmatmul.mubr.bf16.gmra.mrb[0].mxu0 %v295
    %v474 = vpop.f32.mrb[0].mxu0
    %v475 = vadd.f32 %v89, %v474
    %v476 = vpop.f32.mrb[0].mxu0
    %v477 = vpop.f32.mrb[0].mxu0
    %v478 = vadd.f32 %v89, %v477
    %v479 = vpop.f32.mrb[0].mxu0
    %480 = vmatprep.mubr.bf16.mxu0 0
    %481 = vmatmul.mubr.bf16.gmra.mrb[0].mxu0 %v298
    %v482 = vpop.f32.mrb[0].mxu0
    %v483 = vadd.f32 %v89, %v482
    %v484 = vpop.f32.mrb[0].mxu0
    %v485 = vpop.f32.mrb[0].mxu0
    %v486 = vadd.f32 %v89, %v485
    %v487 = vpop.f32.mrb[0].mxu0
    %488 = vmatprep.mubr.bf16.mxu0 0
    %489 = vmatmul.mubr.bf16.gmra.mrb[0].mxu0 %v301
    %v490 = vpop.f32.mrb[0].mxu0
    %v491 = vadd.f32 %v89, %v490
    %v492 = vpop.f32.mrb[0].mxu0
    %v493 = vpop.f32.mrb[0].mxu0
    %v494 = vadd.f32 %v89, %v493
    %v495 = vpop.f32.mrb[0].mxu0
    %496 = vmatprep.mubr.bf16.mxu0 0
    %497 = vmatmul.mubr.bf16.gmra.mrb[0].mxu0 %v304
    %v498 = vpop.f32.mrb[0].mxu0
    %v499 = vadd.f32 %v89, %v498
    %v500 = vpop.f32.mrb[0].mxu0
    %v501 = vpop.f32.mrb[0].mxu0
    %v502 = vadd.f32 %v89, %v501
    %v503 = vpop.f32.mrb[0].mxu0
    %504 = vmatprep.mubr.bf16.mxu0 0
    %505 = vmatmul.mubr.bf16.gmra.mrb[0].mxu0 %v307
    %v506 = vpop.f32.mrb[0].mxu0
    %v507 = vadd.f32 %v89, %v506
    %v508 = vpop.f32.mrb[0].mxu0
    %v509 = vpop.f32.mrb[0].mxu0
    %v510 = vadd.f32 %v89, %v509
    %v511 = vpop.f32.mrb[0].mxu0
    %512 = vmatprep.mubr.bf16.mxu0 0
    %513 = vmatmul.mubr.bf16.gmra.mrb[0].mxu0 %v310
    %v514 = vpop.f32.mrb[0].mxu0
    %v515 = vadd.f32 %v89, %v514
    %v516 = vpop.f32.mrb[0].mxu0
    %v517 = vpop.f32.mrb[0].mxu0
    %v518 = vadd.f32 %v89, %v517
    %v519 = vpop.f32.mrb[0].mxu0
    %520 = vmatprep.mubr.bf16.mxu0 0
    %521 = vmatmul.mubr.bf16.gmra.mrb[0].mxu0 %v313
    %v522 = vpop.f32.mrb[0].mxu0
    %v523 = vadd.f32 %v89, %v522
    %v524 = vpop.f32.mrb[0].mxu0
    %v525 = vpop.f32.mrb[0].mxu0
    %v526 = vadd.f32 %v89, %v525
    %v527 = vpop.f32.mrb[0].mxu0
    %528 = vmatprep.mubr.bf16.mxu0 0
    %529 = vmatmul.mubr.bf16.gmra.mrb[0].mxu0 %v316
    %v530 = vpop.f32.mrb[0].mxu0
    %v531 = vadd.f32 %v89, %v530
    %v532 = vpop.f32.mrb[0].mxu0
    %v533 = vpop.f32.mrb[0].mxu0
    %v534 = vadd.f32 %v89, %v533
    %v535 = vpop.f32.mrb[0].mxu0
    %536 = vmatprep.mubr.bf16.mxu0 0
    %537 = vmatmul.mubr.bf16.gmra.mrb[0].mxu0 %v319
    %v538 = vpop.f32.mrb[0].mxu0
    %v539 = vadd.f32 %v89, %v538
    %v540 = vpop.f32.mrb[0].mxu0
    %v541 = vpop.f32.mrb[0].mxu0
    %v542 = vadd.f32 %v89, %v541
    %v543 = vpop.f32.mrb[0].mxu0
    %544 = vmatprep.mubr.bf16.mxu0 0
    %545 = vmatmul.mubr.bf16.gmra.mrb[0].mxu0 %v322
    %v546 = vpop.f32.mrb[0].mxu0
    %v547 = vadd.f32 %v89, %v546
    %v548 = vpop.f32.mrb[0].mxu0
    %v549 = vpop.f32.mrb[0].mxu0
    %v550 = vadd.f32 %v89, %v549
    %v551 = vpop.f32.mrb[0].mxu0
    %552 = vmatprep.mubr.bf16.mxu0 0
    %553 = vmatmul.mubr.bf16.gmra.mrb[0].mxu0 %v325
    %v554 = vpop.f32.mrb[0].mxu0
    %v555 = vadd.f32 %v89, %v554
    %v556 = vpop.f32.mrb[0].mxu0
    %v557 = vpop.f32.mrb[0].mxu0
    %v558 = vadd.f32 %v89, %v557
    %v559 = vpop.f32.mrb[0].mxu0
    %560 = vmatprep.mubr.bf16.mxu0 0
    %561 = vmatmul.mubr.bf16.gmra.mrb[0].mxu0 %v328
    %v562 = vpop.f32.mrb[0].mxu0
    %v563 = vadd.f32 %v89, %v562
    %v564 = vpop.f32.mrb[0].mxu0
    %v565 = vpop.f32.mrb[0].mxu0
    %v566 = vadd.f32 %v89, %v565
    %v567 = vpop.f32.mrb[0].mxu0
    %568 = vmatprep.mubr.bf16.mxu0 0
    %569 = vmatmul.mubr.bf16.gmra.mrb[0].mxu0 %v331
    %v570 = vpop.f32.mrb[0].mxu0
    %v571 = vadd.f32 %v89, %v570
    %v572 = vpop.f32.mrb[0].mxu0
    %v573 = vpop.f32.mrb[0].mxu0
    %v574 = vadd.f32 %v89, %v573
    %v575 = vpop.f32.mrb[0].mxu0
    %576 = vmatprep.mubr.bf16.mxu0 0
    %577 = vmatmul.mubr.bf16.gmra.mrb[0].mxu0 %v334
    %v578 = vpop.f32.mrb[0].mxu0
    %v579 = vadd.f32 %v89, %v578
    %v580 = vpop.f32.mrb[0].mxu0
    %v581 = vpop.f32.mrb[0].mxu0
    %v582 = vadd.f32 %v89, %v581
    %v583 = vpop.f32.mrb[0].mxu0
    %584 = vmatprep.mubr.bf16.mxu0 0
    %585 = vmatmul.mubr.bf16.gmra.mrb[0].mxu0 %v337
    %v586 = vpop.f32.mrb[0].mxu0
    %v587 = vadd.f32 %v89, %v586
    %v588 = vpop.f32.mrb[0].mxu0
    %v589 = vpop.f32.mrb[0].mxu0
    %v590 = vadd.f32 %v89, %v589
    %v591 = vpop.f32.mrb[0].mxu0
    %592 = vmatprep.mubr.bf16.mxu0 0
    %593 = vmatmul.mubr.bf16.gmra.mrb[0].mxu0 %v340
    %v594 = vpop.f32.mrb[0].mxu0
    %v595 = vadd.f32 %v89, %v594
    %v596 = vpop.f32.mrb[0].mxu0
    %v597 = vpop.f32.mrb[0].mxu0
    %v598 = vadd.f32 %v89, %v597
    %v599 = vpop.f32.mrb[0].mxu0
    %600 = vmatprep.mubr.bf16.mxu0 0
    %601 = vmatmul.mubr.bf16.gmra.mrb[0].mxu0 %v343
    %v602 = vpop.f32.mrb[0].mxu0
    %v603 = vadd.f32 %v89, %v602
    %v604 = vpop.f32.mrb[0].mxu0
    %v605 = vpop.f32.mrb[0].mxu0
    %v606 = vadd.f32 %v89, %v605
    %v607 = vpop.f32.mrb[0].mxu0
    %608 = vmatprep.mubr.bf16.mxu0 0
    %609 = vmatmul.mubr.bf16.gmra.mrb[0].mxu0 %v346
    %v610 = vpop.f32.mrb[0].mxu0
    %v611 = vadd.f32 %v89, %v610
    %v612 = vpop.f32.mrb[0].mxu0
    %v613 = vpop.f32.mrb[0].mxu0
    %v614 = vadd.f32 %v89, %v613
    %v615 = vpop.f32.mrb[0].mxu0
    %616 = vmatprep.mubr.bf16.mxu0 0
    %617 = vmatmul.mubr.bf16.gmra.mrb[0].mxu0 %v349
    %v618 = vpop.f32.mrb[0].mxu0
    %v619 = vadd.f32 %v89, %v618
    %v620 = vpop.f32.mrb[0].mxu0
    %v621 = vpop.f32.mrb[0].mxu0
    %v622 = vadd.f32 %v89, %v621
    %v623 = vpop.f32.mrb[0].mxu0
    %624 = vmatprep.mubr.bf16.mxu0 0
    %625 = vmatmul.mubr.bf16.gmra.mrb[0].mxu0 %v352
    %v626 = vpop.f32.mrb[0].mxu0
    %v627 = vadd.f32 %v89, %v626
    %v628 = vpop.f32.mrb[0].mxu0
    %v629 = vpop.f32.mrb[0].mxu0
    %v630 = vadd.f32 %v89, %v629
    %v631 = vpop.f32.mrb[0].mxu0
    %632 = vmatprep.mubr.bf16.mxu0 0
    %633 = vmatmul.mubr.bf16.gmra.mrb[0].mxu0 %v355
    %v634 = vpop.f32.mrb[0].mxu0
    %v635 = vadd.f32 %v89, %v634
    %v636 = vpop.f32.mrb[0].mxu0
    %v637 = vpop.f32.mrb[0].mxu0
    %v638 = vadd.f32 %v89, %v637
    %v639 = vpop.f32.mrb[0].mxu0
    %640 = vmatprep.mubr.bf16.mxu0 0
    %641 = vmatmul.mubr.bf16.gmra.mrb[0].mxu0 %v358
    %v642 = vpop.f32.mrb[0].mxu0
    %v643 = vadd.f32 %v89, %v642
    %v644 = vpop.f32.mrb[0].mxu0
    %v645 = vpop.f32.mrb[0].mxu0
    %v646 = vadd.f32 %v89, %v645
    %v647 = vpop.f32.mrb[0].mxu0
    %648 = vdwg.mxu0
    %v649 = vmax.f32 %v395, 0.0
    %v650 = vmax.f32 %v398, 0.0
    %v651 = vmax.f32 %v403, 0.0
    %v652 = vmax.f32 %v406, 0.0
    %v653 = vmax.f32 %v411, 0.0
    %v654 = vmax.f32 %v414, 0.0
    %v655 = vmax.f32 %v419, 0.0
    %v656 = vmax.f32 %v422, 0.0
    %v657 = vmax.f32 %v427, 0.0
    %v658 = vmax.f32 %v430, 0.0
    %v659 = vmax.f32 %v435, 0.0
    %v660 = vmax.f32 %v438, 0.0
    %v661 = vmax.f32 %v443, 0.0
    %v662 = vmax.f32 %v446, 0.0
    %v663 = vmax.f32 %v451, 0.0
    %v664 = vmax.f32 %v454, 0.0
    %v665 = vmax.f32 %v459, 0.0
    %v666 = vmax.f32 %v462, 0.0
    %v667 = vmax.f32 %v467, 0.0
    %v668 = vmax.f32 %v470, 0.0
    %v669 = vmax.f32 %v475, 0.0
    %v670 = vmax.f32 %v478, 0.0
    %v671 = vmax.f32 %v483, 0.0
    %v672 = vmax.f32 %v486, 0.0
    %v673 = vmax.f32 %v491, 0.0
    %v674 = vmax.f32 %v494, 0.0
    %v675 = vmax.f32 %v499, 0.0
    %v676 = vmax.f32 %v502, 0.0
    %v677 = vmax.f32 %v507, 0.0
    %v678 = vmax.f32 %v510, 0.0
    %v679 = vmax.f32 %v515, 0.0
    %v680 = vmax.f32 %v518, 0.0
    %v681 = vmax.f32 %v523, 0.0
    %v682 = vmax.f32 %v526, 0.0
    %v683 = vmax.f32 %v531, 0.0
    %v684 = vmax.f32 %v534, 0.0
    %v685 = vmax.f32 %v539, 0.0
    %v686 = vmax.f32 %v542, 0.0
    %v687 = vmax.f32 %v547, 0.0
    %v688 = vmax.f32 %v550, 0.0
    %v689 = vmax.f32 %v555, 0.0
    %v690 = vmax.f32 %v558, 0.0
    %v691 = vmax.f32 %v563, 0.0
    %v692 = vmax.f32 %v566, 0.0
    %v693 = vmax.f32 %v571, 0.0
    %v694 = vmax.f32 %v574, 0.0
    %v695 = vmax.f32 %v579, 0.0
    %v696 = vmax.f32 %v582, 0.0
    %v697 = vmax.f32 %v587, 0.0
    %v698 = vmax.f32 %v590, 0.0
    %v699 = vmax.f32 %v595, 0.0
    %v700 = vmax.f32 %v598, 0.0
    %v701 = vmax.f32 %v603, 0.0
    %v702 = vmax.f32 %v606, 0.0
    %v703 = vmax.f32 %v611, 0.0
    %v704 = vmax.f32 %v614, 0.0
    %v705 = vmax.f32 %v619, 0.0
    %v706 = vmax.f32 %v622, 0.0
    %v707 = vmax.f32 %v627, 0.0
    %v708 = vmax.f32 %v630, 0.0
    %v709 = vmax.f32 %v635, 0.0
    %v710 = vmax.f32 %v638, 0.0
    %v711 = vmax.f32 %v643, 0.0
    %v712 = vmax.f32 %v646, 0.0
    %v713 = vmin.f32 %v649, 6.0
    %v714 = vmin.f32 %v650, 6.0
    %v715 = vmin.f32 %v651, 6.0
    %v716 = vmin.f32 %v652, 6.0
    %v717 = vmin.f32 %v653, 6.0
    %v718 = vmin.f32 %v654, 6.0
    %v719 = vmin.f32 %v655, 6.0
    %v720 = vmin.f32 %v656, 6.0
    %v721 = vmin.f32 %v657, 6.0
    %v722 = vmin.f32 %v658, 6.0
    %v723 = vmin.f32 %v659, 6.0
    %v724 = vmin.f32 %v660, 6.0
    %v725 = vmin.f32 %v661, 6.0
    %v726 = vmin.f32 %v662, 6.0
    %v727 = vmin.f32 %v663, 6.0
    %v728 = vmin.f32 %v664, 6.0
    %v729 = vmin.f32 %v665, 6.0
    %v730 = vmin.f32 %v666, 6.0
    %v731 = vmin.f32 %v667, 6.0
    %v732 = vmin.f32 %v668, 6.0
    %v733 = vmin.f32 %v669, 6.0
    %v734 = vmin.f32 %v670, 6.0
    %v735 = vmin.f32 %v671, 6.0
    %v736 = vmin.f32 %v672, 6.0
    %v737 = vmin.f32 %v673, 6.0
    %v738 = vmin.f32 %v674, 6.0
    %v739 = vmin.f32 %v675, 6.0
    %v740 = vmin.f32 %v676, 6.0
    %v741 = vmin.f32 %v677, 6.0
    %v742 = vmin.f32 %v678, 6.0
    %v743 = vmin.f32 %v679, 6.0
    %v744 = vmin.f32 %v680, 6.0
    %v745 = vmin.f32 %v681, 6.0
    %v746 = vmin.f32 %v682, 6.0
    %v747 = vmin.f32 %v683, 6.0
    %v748 = vmin.f32 %v684, 6.0
    %v749 = vmin.f32 %v685, 6.0
    %v750 = vmin.f32 %v686, 6.0
    %v751 = vmin.f32 %v687, 6.0
    %v752 = vmin.f32 %v688, 6.0
    %v753 = vmin.f32 %v689, 6.0
    %v754 = vmin.f32 %v690, 6.0
    %v755 = vmin.f32 %v691, 6.0
    %v756 = vmin.f32 %v692, 6.0
    %v757 = vmin.f32 %v693, 6.0
    %v758 = vmin.f32 %v694, 6.0
    %v759 = vmin.f32 %v695, 6.0
    %v760 = vmin.f32 %v696, 6.0
    %v761 = vmin.f32 %v697, 6.0
    %v762 = vmin.f32 %v698, 6.0
    %v763 = vmin.f32 %v699, 6.0
    %v764 = vmin.f32 %v700, 6.0
    %v765 = vmin.f32 %v701, 6.0
    %v766 = vmin.f32 %v702, 6.0
    %v767 = vmin.f32 %v703, 6.0
    %v768 = vmin.f32 %v704, 6.0
    %v769 = vmin.f32 %v705, 6.0
    %v770 = vmin.f32 %v706, 6.0
    %v771 = vmin.f32 %v707, 6.0
    %v772 = vmin.f32 %v708, 6.0
    %v773 = vmin.f32 %v709, 6.0
    %v774 = vmin.f32 %v710, 6.0
    %v775 = vmin.f32 %v711, 6.0
    %v776 = vmin.f32 %v712, 6.0
    %v777 = vpack.c.bf16 %v714, %v713
    %v778 = vpack.c.bf16 %v716, %v715
    %v779 = vpack.c.bf16 %v718, %v717
    %v780 = vpack.c.bf16 %v720, %v719
    %v781 = vpack.c.bf16 %v722, %v721
    %v782 = vpack.c.bf16 %v724, %v723
    %v783 = vpack.c.bf16 %v726, %v725
    %v784 = vpack.c.bf16 %v728, %v727
    %v785 = vpack.c.bf16 %v730, %v729
    %v786 = vpack.c.bf16 %v732, %v731
    %v787 = vpack.c.bf16 %v734, %v733
    %v788 = vpack.c.bf16 %v736, %v735
    %v789 = vpack.c.bf16 %v738, %v737
    %v790 = vpack.c.bf16 %v740, %v739
    %v791 = vpack.c.bf16 %v742, %v741
    %v792 = vpack.c.bf16 %v744, %v743
    %v793 = vpack.c.bf16 %v746, %v745
    %v794 = vpack.c.bf16 %v748, %v747
    %v795 = vpack.c.bf16 %v750, %v749
    %v796 = vpack.c.bf16 %v752, %v751
    %v797 = vpack.c.bf16 %v754, %v753
    %v798 = vpack.c.bf16 %v756, %v755
    %v799 = vpack.c.bf16 %v758, %v757
    %v800 = vpack.c.bf16 %v760, %v759
    %v801 = vpack.c.bf16 %v762, %v761
    %v802 = vpack.c.bf16 %v764, %v763
    %v803 = vpack.c.bf16 %v766, %v765
    %v804 = vpack.c.bf16 %v768, %v767
    %v805 = vpack.c.bf16 %v770, %v769
    %v806 = vpack.c.bf16 %v772, %v771
    %v807 = vpack.c.bf16 %v774, %v773
    %v808 = vpack.c.bf16 %v776, %v775
    %v841 = vunpack.c.l.b16 %v777
    %v842 = vunpack.c.h.b16 %v777
    %v843 = vunpack.c.l.b16 %v778
    %v844 = vunpack.c.h.b16 %v778
    %v845 = vunpack.c.l.b16 %v779
    %v846 = vunpack.c.h.b16 %v779
    %v847 = vunpack.c.l.b16 %v780
    %v848 = vunpack.c.h.b16 %v780
    %v849 = vunpack.c.l.b16 %v781
    %v850 = vunpack.c.h.b16 %v781
    %v851 = vunpack.c.l.b16 %v782
    %v852 = vunpack.c.h.b16 %v782
    %v853 = vunpack.c.l.b16 %v783
    %v854 = vunpack.c.h.b16 %v783
    %v855 = vunpack.c.l.b16 %v784
    %v856 = vunpack.c.h.b16 %v784
    %v857 = vunpack.c.l.b16 %v785
    %v858 = vunpack.c.h.b16 %v785
    %v859 = vunpack.c.l.b16 %v786
    %v860 = vunpack.c.h.b16 %v786
    %v861 = vunpack.c.l.b16 %v787
    %v862 = vunpack.c.h.b16 %v787
    %v863 = vunpack.c.l.b16 %v788
    %v864 = vunpack.c.h.b16 %v788
    %v865 = vunpack.c.l.b16 %v789
    %v866 = vunpack.c.h.b16 %v789
    %v867 = vunpack.c.l.b16 %v790
    %v868 = vunpack.c.h.b16 %v790
    %v869 = vunpack.c.l.b16 %v791
    %v870 = vunpack.c.h.b16 %v791
    %v871 = vunpack.c.l.b16 %v792
    %v872 = vunpack.c.h.b16 %v792
    %v873 = vunpack.c.l.b16 %v793
    %v874 = vunpack.c.h.b16 %v793
    %v875 = vunpack.c.l.b16 %v794
    %v876 = vunpack.c.h.b16 %v794
    %v877 = vunpack.c.l.b16 %v795
    %v878 = vunpack.c.h.b16 %v795
    %v879 = vunpack.c.l.b16 %v796
    %v880 = vunpack.c.h.b16 %v796
    %v881 = vunpack.c.l.b16 %v797
    %v882 = vunpack.c.h.b16 %v797
    %v883 = vunpack.c.l.b16 %v798
    %v884 = vunpack.c.h.b16 %v798
    %v885 = vunpack.c.l.b16 %v799
    %v886 = vunpack.c.h.b16 %v799
    %v887 = vunpack.c.l.b16 %v800
    %v888 = vunpack.c.h.b16 %v800
    %v889 = vunpack.c.l.b16 %v801
    %v890 = vunpack.c.h.b16 %v801
    %v891 = vunpack.c.l.b16 %v802
    %v892 = vunpack.c.h.b16 %v802
    %v893 = vunpack.c.l.b16 %v803
    %v894 = vunpack.c.h.b16 %v803
    %v895 = vunpack.c.l.b16 %v804
    %v896 = vunpack.c.h.b16 %v804
    %v897 = vunpack.c.l.b16 %v805
    %v898 = vunpack.c.h.b16 %v805
    %v899 = vunpack.c.l.b16 %v806
    %v900 = vunpack.c.h.b16 %v806
    %v901 = vunpack.c.l.b16 %v807
    %v902 = vunpack.c.h.b16 %v807
    %v903 = vunpack.c.l.b16 %v808
    %v904 = vunpack.c.h.b16 %v808
    %v905 = vpack.c.b16 %v841, %v841
    %v906 = vpack.c.b16 %v842, %v842
    %v907 = vpack.c.b16 %v843, %v843
    %v908 = vpack.c.b16 %v844, %v844
    %v909 = vpack.c.b16 %v845, %v845
    %v910 = vpack.c.b16 %v846, %v846
    %v911 = vpack.c.b16 %v847, %v847
    %v912 = vpack.c.b16 %v848, %v848
    %v913 = vpack.c.b16 %v849, %v849
    %v914 = vpack.c.b16 %v850, %v850
    %v915 = vpack.c.b16 %v851, %v851
    %v916 = vpack.c.b16 %v852, %v852
    %v917 = vpack.c.b16 %v853, %v853
    %v918 = vpack.c.b16 %v854, %v854
    %v919 = vpack.c.b16 %v855, %v855
    %v920 = vpack.c.b16 %v856, %v856
    %v921 = vpack.c.b16 %v857, %v857
    %v922 = vpack.c.b16 %v858, %v858
    %v923 = vpack.c.b16 %v859, %v859
    %v924 = vpack.c.b16 %v860, %v860
    %v925 = vpack.c.b16 %v861, %v861
    %v926 = vpack.c.b16 %v862, %v862
    %v927 = vpack.c.b16 %v863, %v863
    %v928 = vpack.c.b16 %v864, %v864
    %v929 = vpack.c.b16 %v865, %v865
    %v930 = vpack.c.b16 %v866, %v866
    %v931 = vpack.c.b16 %v867, %v867
    %v932 = vpack.c.b16 %v868, %v868
    %v933 = vpack.c.b16 %v869, %v869
    %v934 = vpack.c.b16 %v870, %v870
    %v935 = vpack.c.b16 %v871, %v871
    %v936 = vpack.c.b16 %v872, %v872
    %v937 = vpack.c.b16 %v873, %v873
    %v938 = vpack.c.b16 %v874, %v874
    %v939 = vpack.c.b16 %v875, %v875
    %v940 = vpack.c.b16 %v876, %v876
    %v941 = vpack.c.b16 %v877, %v877
    %v942 = vpack.c.b16 %v878, %v878
    %v943 = vpack.c.b16 %v879, %v879
    %v944 = vpack.c.b16 %v880, %v880
    %v945 = vpack.c.b16 %v881, %v881
    %v946 = vpack.c.b16 %v882, %v882
    %v947 = vpack.c.b16 %v883, %v883
    %v948 = vpack.c.b16 %v884, %v884
    %v949 = vpack.c.b16 %v885, %v885
    %v950 = vpack.c.b16 %v886, %v886
    %v951 = vpack.c.b16 %v887, %v887
    %v952 = vpack.c.b16 %v888, %v888
    %v953 = vpack.c.b16 %v889, %v889
    %v954 = vpack.c.b16 %v890, %v890
    %v955 = vpack.c.b16 %v891, %v891
    %v956 = vpack.c.b16 %v892, %v892
    %v957 = vpack.c.b16 %v893, %v893
    %v958 = vpack.c.b16 %v894, %v894
    %v959 = vpack.c.b16 %v895, %v895
    %v960 = vpack.c.b16 %v896, %v896
    %v961 = vpack.c.b16 %v897, %v897
    %v962 = vpack.c.b16 %v898, %v898
    %v963 = vpack.c.b16 %v899, %v899
    %v964 = vpack.c.b16 %v900, %v900
    %v965 = vpack.c.b16 %v901, %v901
    %v966 = vpack.c.b16 %v902, %v902
    %v967 = vpack.c.b16 %v903, %v903
    %v968 = vpack.c.b16 %v904, %v904
    %1033 = vst [vmem:[#allocation2] sm:$0xf] %v905
    %1034 = vst [vmem:[#allocation2 + $0x4] sm:$0xf] %v906
    %1035 = vst [vmem:[#allocation2 + $0x8] sm:$0xf] %v907
    %1036 = vst [vmem:[#allocation2 + $0xc] sm:$0xf] %v908
    %1037 = vst [vmem:[#allocation2 + $0x10] sm:$0xf] %v909
    %1038 = vst [vmem:[#allocation2 + $0x14] sm:$0xf] %v910
    %1039 = vst [vmem:[#allocation2 + $0x18] sm:$0xf] %v911
    %1040 = vst [vmem:[#allocation2 + $0x1c] sm:$0xf] %v912
    %1041 = vst [vmem:[#allocation2 + $0x20] sm:$0xf] %v913
    %1042 = vst [vmem:[#allocation2 + $0x24] sm:$0xf] %v914
    %1043 = vst [vmem:[#allocation2 + $0x28] sm:$0xf] %v915
    %1044 = vst [vmem:[#allocation2 + $0x2c] sm:$0xf] %v916
    %1045 = vst [vmem:[#allocation2 + $0x30] sm:$0xf] %v917
    %1046 = vst [vmem:[#allocation2 + $0x34] sm:$0xf] %v918
    %1047 = vst [vmem:[#allocation2 + $0x38] sm:$0xf] %v919
    %1048 = vst [vmem:[#allocation2 + $0x3c] sm:$0xf] %v920
    %1049 = vst [vmem:[#allocation2 + $0x40] sm:$0xf] %v921
    %1050 = vst [vmem:[#allocation2 + $0x44] sm:$0xf] %v922
    %1051 = vst [vmem:[#allocation2 + $0x48] sm:$0xf] %v923
    %1052 = vst [vmem:[#allocation2 + $0x4c] sm:$0xf] %v924
    %1053 = vst [vmem:[#allocation2 + $0x50] sm:$0xf] %v925
    %1054 = vst [vmem:[#allocation2 + $0x54] sm:$0xf] %v926
    %1055 = vst [vmem:[#allocation2 + $0x58] sm:$0xf] %v927
    %1056 = vst [vmem:[#allocation2 + $0x5c] sm:$0xf] %v928
    %1057 = vst [vmem:[#allocation2 + $0x60] sm:$0xf] %v929
    %1058 = vst [vmem:[#allocation2 + $0x64] sm:$0xf] %v930
    %1059 = vst [vmem:[#allocation2 + $0x68] sm:$0xf] %v931
    %1060 = vst [vmem:[#allocation2 + $0x6c] sm:$0xf] %v932
    %1061 = vst [vmem:[#allocation2 + $0x70] sm:$0xf] %v933
    %1062 = vst [vmem:[#allocation2 + $0x74] sm:$0xf] %v934
    %1063 = vst [vmem:[#allocation2 + $0x78] sm:$0xf] %v935
    %1064 = vst [vmem:[#allocation2 + $0x7c] sm:$0xf] %v936
    %1065 = vst [vmem:[#allocation2 + $0x80] sm:$0xf] %v937
    %1066 = vst [vmem:[#allocation2 + $0x84] sm:$0xf] %v938
    %1067 = vst [vmem:[#allocation2 + $0x88] sm:$0xf] %v939
    %1068 = vst [vmem:[#allocation2 + $0x8c] sm:$0xf] %v940
    %1069 = vst [vmem:[#allocation2 + $0x90] sm:$0xf] %v941
    %1070 = vst [vmem:[#allocation2 + $0x94] sm:$0xf] %v942
    %1071 = vst [vmem:[#allocation2 + $0x98] sm:$0xf] %v943
    %1072 = vst [vmem:[#allocation2 + $0x9c] sm:$0xf] %v944
    %1073 = vst [vmem:[#allocation2 + $0xa0] sm:$0xf] %v945
    %1074 = vst [vmem:[#allocation2 + $0xa4] sm:$0xf] %v946
    %1075 = vst [vmem:[#allocation2 + $0xa8] sm:$0xf] %v947
    %1076 = vst [vmem:[#allocation2 + $0xac] sm:$0xf] %v948
    %1077 = vst [vmem:[#allocation2 + $0xb0] sm:$0xf] %v949
    %1078 = vst [vmem:[#allocation2 + $0xb4] sm:$0xf] %v950
    %1079 = vst [vmem:[#allocation2 + $0xb8] sm:$0xf] %v951
    %1080 = vst [vmem:[#allocation2 + $0xbc] sm:$0xf] %v952
    %1081 = vst [vmem:[#allocation2 + $0xc0] sm:$0xf] %v953
    %1082 = vst [vmem:[#allocation2 + $0xc4] sm:$0xf] %v954
    %1083 = vst [vmem:[#allocation2 + $0xc8] sm:$0xf] %v955
    %1084 = vst [vmem:[#allocation2 + $0xcc] sm:$0xf] %v956
    %1085 = vst [vmem:[#allocation2 + $0xd0] sm:$0xf] %v957
    %1086 = vst [vmem:[#allocation2 + $0xd4] sm:$0xf] %v958
    %1087 = vst [vmem:[#allocation2 + $0xd8] sm:$0xf] %v959
    %1088 = vst [vmem:[#allocation2 + $0xdc] sm:$0xf] %v960
    %1089 = vst [vmem:[#allocation2 + $0xe0] sm:$0xf] %v961
    %1090 = vst [vmem:[#allocation2 + $0xe4] sm:$0xf] %v962
    %1091 = vst [vmem:[#allocation2 + $0xe8] sm:$0xf] %v963
    %1092 = vst [vmem:[#allocation2 + $0xec] sm:$0xf] %v964
    %1093 = vst [vmem:[#allocation2 + $0xf0] sm:$0xf] %v965
    %1094 = vst [vmem:[#allocation2 + $0xf4] sm:$0xf] %v966
    %1095 = vst [vmem:[#allocation2 + $0xf8] sm:$0xf] %v967
    %1096 = vst [vmem:[#allocation2 + $0xfc] sm:$0xf] %v968
    // Predicated region
    $region14: #{tpu_custom_call.1} parent=1 // pred_check
      _
    $region15: #{tpu_custom_call.1} parent=1 // pred_check_branch
      %1098 = sbr.rel (0) target = $region17
    $region16: #{tpu_custom_call.1} parent=1 // pred_region
      %s1100 = ssub.s32 4096, 4096
      %1101 = vsyncadd [#allocation3], %s1100
      %s1102 = sshll.u32 [#allocation2], 4
      %s1103 = int_to_ptr.vmem [resolvable:$true] %s1102
      %1108 = dma.vmem_to_hbm [thread:$0]  %s1103, 4096, %s3, [#allocation3], 64, 64, 4
    $region17: #{tpu_custom_call.1} parent=1 // pred_fallthru
      _
    // Predicated region
    $region18: #{tpu_custom_call.1} parent=1 // pred_check
      _
    $region19: #{tpu_custom_call.1} parent=1 // pred_check_branch
      %1110 = sbr.rel (0) target = $region21
    $region20: #{tpu_custom_call.1} parent=1 // pred_region
      %1111 = dma.done [#allocation3], 4096
    $region21: #{tpu_custom_call.1} parent=1 // pred_fallthru
      _
    %1112 = vsyncpa [#allocation3], 1

</llo_original>
